<compile_context>
chip_gen: v7x
topology: tpu7x:2x2x1
jax: 0.10.0
libtpu: 0.0.40
codegen_flags: <defaults>
</compile_context>

<pallas_src>
import functools

import jax
import jax.numpy as jnp
from jax import lax
from jax.experimental import pallas as pl
from jax.experimental.pallas import tpu as pltpu


def _round_up(x, m):
    return ((x + m - 1) // m) * m


def _rmsnorm_kernel_weighted(x_ref, w_ref, o_ref, *, eps, inv_dim):
    # Upcast to f32 exactly like the PyTorch module (x.float()).
    x = x_ref[...].astype(jnp.float32)
    # mean(x^2) over the TRUE hidden dim (block last dim == dim, no padding).
    ms = jnp.sum(x * x, axis=-1, keepdims=True) * inv_dim
    norm = lax.rsqrt(ms + eps)
    w = w_ref[...].astype(jnp.float32)            # (1, D) broadcast, loaded once
    # weight applied BEFORE the downcast, matching (x*norm*weight).to(dtype).
    o_ref[...] = (x * norm * w).astype(o_ref.dtype)


def _rmsnorm_kernel_plain(x_ref, o_ref, *, eps, inv_dim):
    x = x_ref[...].astype(jnp.float32)
    ms = jnp.sum(x * x, axis=-1, keepdims=True) * inv_dim
    norm = lax.rsqrt(ms + eps)
    o_ref[...] = (x * norm).astype(o_ref.dtype)


def rmsnorm_pallas(x, weight=None, eps=1e-6, row_block=None):
    """RMSNorm over the last dim of x. weight: optional (dim,) scale."""
    orig_shape = x.shape
    dim = orig_shape[-1]
    x2d = x.reshape(-1, dim)          # collapsing leading dims: layout no-op
    n_rows = x2d.shape[0]
    itemsize = jnp.dtype(x.dtype).itemsize

    # Native minimum sublane tile for this dtype: 8 (f32), 16 (bf16), 32 (i8/fp8).
    sub = max(8, 32 // itemsize)

    # Generation-aware VMEM sizing (v5e/v6e: 128 MiB, v7x: 64 MiB per TC).
    try:
        vmem_cap = int(pltpu.get_tpu_info().vmem_capacity_bytes)
    except Exception:
        vmem_cap = 64 * 1024 * 1024   # conservative fallback (v7x per-TC)
    budget = int(vmem_cap * 0.60)     # pipelined-buffer budget

    # Per-row VMEM estimate: 2x dbl-buffered in + 2x dbl-buffered out (+ f32
    # working copies). Use the internal 128-lane-padded width to stay safe.
    lane_dim = _round_up(dim, 128)
    per_row_bytes = lane_dim * (4 * itemsize + 8)

    if row_block is None:
        row_block = max(sub, min(1024, budget // per_row_bytes))
    row_block = max(sub, (int(row_block) // sub) * sub)
    # Don't use a block (much) larger than the row count.
    row_block = min(row_block, _round_up(n_rows, sub))
    # Guarantee >=2 parallel grid steps when possible so both v7x TCs get work.
    if n_rows >= 2 * sub and pl.cdiv(n_rows, row_block) < 2:
        row_block = _round_up(pl.cdiv(n_rows, 2), sub)

    grid = (pl.cdiv(n_rows, row_block),)
    inv_dim = 1.0 / float(dim)

    # Scoped VMEM limit: enough for the chosen tile, but capped well below the
    # physical capacity (~46 MiB on v7x, ~92 MiB on v5e/v6e) to leave Mosaic
    # headroom for internal scratch / spill slabs.
    vmem_est = row_block * per_row_bytes + (1 << 20)
    vmem_cap_limit = min(int(vmem_cap * 0.72), 100 * 1024 * 1024)
    vmem_limit = int(min(max(vmem_est, 32 * 1024 * 1024), vmem_cap_limit))

    cparams = pltpu.CompilerParams(
        dimension_semantics=("parallel",),
        vmem_limit_bytes=vmem_limit,
    )

    # Advisory cost hint for the XLA scheduler (square + sum + 2 muls per elem,
    # one rsqrt per row, read + write of x).
    cost = pl.CostEstimate(
        flops=4 * n_rows * dim,
        transcendentals=n_rows,
        bytes_accessed=2 * n_rows * dim * itemsize,
    )

    x_spec = pl.BlockSpec((row_block, dim), lambda i: (i, 0))
    o_spec = pl.BlockSpec((row_block, dim), lambda i: (i, 0))
    out_shape = jax.ShapeDtypeStruct((n_rows, dim), x.dtype)

    if weight is not None:
        w2d = weight.astype(jnp.float32).reshape(1, dim)
        kernel = functools.partial(_rmsnorm_kernel_weighted, eps=eps, inv_dim=inv_dim)
        out = pl.pallas_call(
            kernel,
            out_shape=out_shape,
            grid_spec=pltpu.PrefetchScalarGridSpec(
                num_scalar_prefetch=0,
                grid=grid,
                in_specs=[x_spec, pl.BlockSpec((1, dim), lambda i: (0, 0))],
                out_specs=o_spec,
            ),
            compiler_params=cparams,
            cost_estimate=cost,
        )(x2d, w2d)
    else:
        # trainable=False path: no weight array streamed, no extra multiply.
        kernel = functools.partial(_rmsnorm_kernel_plain, eps=eps, inv_dim=inv_dim)
        out = pl.pallas_call(
            kernel,
            out_shape=out_shape,
            grid_spec=pltpu.PrefetchScalarGridSpec(
                num_scalar_prefetch=0,
                grid=grid,
                in_specs=[x_spec],
                out_specs=o_spec,
            ),
            compiler_params=cparams,
            cost_estimate=cost,
        )(x2d)

    return out.reshape(orig_shape)


def rmsnorm_ref(x, weight=None, eps=1e-6):
    x_dtype = x.dtype
    xf = x.astype(jnp.float32)
    norm = lax.rsqrt(jnp.mean(xf * xf, axis=-1, keepdims=True) + eps)
    out = xf * norm
    if weight is not None:
        out = out * weight.astype(jnp.float32)
    return out.astype(x_dtype)


if __name__ == "__main__":
    key = jax.random.PRNGKey(0)
    B, S, D = 2, 8, 32
    x = jax.random.normal(key, (B, S, D), dtype=jnp.bfloat16)

    # trainable=True: weight initialized deterministically to ones (as in __init__).
    weight = jnp.ones((D,), dtype=jnp.float32)

    out = jax.block_until_ready(rmsnorm_pallas(x, weight=weight, eps=1e-6))
    # trainable=False path (weight=None)
    out_nw = jax.block_until_ready(rmsnorm_pallas(x, weight=None, eps=1e-6))

    ref = rmsnorm_ref(x, weight=weight, eps=1e-6)
    ref_nw = rmsnorm_ref(x, weight=None, eps=1e-6)

    assert out.dtype == x.dtype and out.shape == x.shape
    assert out_nw.dtype == x.dtype and out_nw.shape == x.shape
    assert jnp.allclose(out.astype(jnp.float32), ref.astype(jnp.float32),
                        atol=1e-2, rtol=1e-2)
    assert jnp.allclose(out_nw.astype(jnp.float32), ref_nw.astype(jnp.float32),
                        atol=1e-2, rtol=1e-2)
    print("KERNEL_OK")
</pallas_src>

<mosaic_0001>
module attributes {stable_mosaic.version = 11 : i64} {
  func.func @_rmsnorm_kernel_weighted(%arg0: i32, %arg1: memref<16x32xbf16, #tpu.memory_space<vmem>>, %arg2: memref<1x32xf32, #tpu.memory_space<vmem>>, %arg3: memref<16x32xbf16, #tpu.memory_space<vmem>>) attributes {dimension_semantics = [#tpu.dimension_semantics<parallel>], iteration_bounds = array<i64: 1>, scalar_prefetch = 0 : i64, scratch_operands = 0 : i64, tpu.core_type = #tpu.core_type<tc>, window_params = [{transform_indices = @transform_0, window_bounds = array<i64: 16, 32>}, {pipeline_mode = #tpu.pipeline_mode<synchronous>, transform_indices = @transform_1, window_bounds = array<i64: 1, 32>}, {transform_indices = @transform_2, window_bounds = array<i64: 16, 32>}]} {
    %c0 = arith.constant 0 : index
    %c0_0 = arith.constant 0 : index
    %0 = vector.load %arg1[%c0, %c0_0] : memref<16x32xbf16, #tpu.memory_space<vmem>>, vector<16x32xbf16>
    %1 = arith.extf %0 : vector<16x32xbf16> to vector<16x32xf32>
    %2 = arith.mulf %1, %1 : vector<16x32xf32>
    %cst = arith.constant dense<0.000000e+00> : vector<16xf32>
    %3 = vector.multi_reduction <add>, %2, %cst [1] : vector<16x32xf32> to vector<16xf32>
    %4 = vector.shape_cast %3 : vector<16xf32> to vector<16x1xf32>
    %cst_1 = arith.constant 3.125000e-02 : f32
    %5 = vector.broadcast %cst_1 : f32 to vector<16x1xf32>
    %6 = arith.mulf %4, %5 : vector<16x1xf32>
    %cst_2 = arith.constant 9.99999997E-7 : f32
    %7 = vector.broadcast %cst_2 : f32 to vector<16x1xf32>
    %8 = arith.addf %6, %7 : vector<16x1xf32>
    %9 = math.rsqrt %8 : vector<16x1xf32>
    %c0_3 = arith.constant 0 : index
    %c0_4 = arith.constant 0 : index
    %10 = vector.load %arg2[%c0_3, %c0_4] : memref<1x32xf32, #tpu.memory_space<vmem>>, vector<1x32xf32>
    %11 = vector.broadcast %9 : vector<16x1xf32> to vector<16x32xf32>
    %12 = arith.mulf %1, %11 : vector<16x32xf32>
    %13 = vector.broadcast %10 : vector<1x32xf32> to vector<16x32xf32>
    %14 = arith.mulf %12, %13 : vector<16x32xf32>
    %15 = arith.truncf %14 : vector<16x32xf32> to vector<16x32xbf16>
    %c0_5 = arith.constant 0 : index
    %c0_6 = arith.constant 0 : index
    %16 = vector.load %arg3[%c0_5, %c0_6] : memref<16x32xbf16, #tpu.memory_space<vmem>>, vector<16x32xbf16>
    tpu.vector_store %arg3[%c0_5, %c0_6], %15 {strides = array<i32>} : memref<16x32xbf16, #tpu.memory_space<vmem>>, vector<16x32xbf16>,
    return
  }
  func.func @transform_0(%arg0: i32) -> (i32, i32) {
    %c0_i32 = arith.constant 0 : i32
    %c0_i32_0 = arith.constant 0 : i32
    return %arg0, %c0_i32 : i32, i32
  }
  func.func @transform_1(%arg0: i32) -> (i32, i32) {
    %c0_i32 = arith.constant 0 : i32
    %c0_i32_0 = arith.constant 0 : i32
    %c0_i32_1 = arith.constant 0 : i32
    return %c0_i32, %c0_i32_0 : i32, i32
  }
  func.func @transform_2(%arg0: i32) -> (i32, i32) {
    %c0_i32 = arith.constant 0 : i32
    %c0_i32_0 = arith.constant 0 : i32
    return %arg0, %c0_i32 : i32, i32
  }
}

</mosaic_0001>

<llo_original>
// kernel: tpu_custom_call.1
$region0: #{tpu_custom_call.1}
  #allocation0 [shape = 'u32[]', space=smem, size = 0x4, offset = 0x4, fixed_abs, tag = 'smem constant byte address 0x4 - core index']
  #allocation1 [shape = 'u32[144,128]{1,0:T(1,128)}', space=vmem, size = 0x12000, scoped, tag = 'internal scratch']
  %s0 = inlined_call_operand.hbm [shape: bf16[16,32], index: 0, kind: input, shape index: {}]
  %s1 = inlined_call_operand.vmem [shape: f32[1,32], index: 1, kind: input, shape index: {}]
  %s2 = inlined_call_operand.hbm [shape: bf16[16,32], index: 2, kind: output, shape index: {}]
  %s3 = sld [smem:[#allocation0]]
  $region22: #{tpu_custom_call.1} parent=0
    _
  %s5 = ssub.s32 1, %s3
  %s6 = scalar_select 0, %s5, %s3
  $region1: #{tpu_custom_call.1} parent=0
    #allocation2 [shape = 'u8[4096]{0}', space=vmem, size = 0x1000, scoped, tag = 'input window, operand 0, single buffered']
    #allocation3 [shape = 's32[1]{0}', space=sflag, size = 0x4, scoped, tag = 'scoped memory for tpu_custom_call.1']
    #allocation4 [shape = 's32[1]{0}', space=sflag, size = 0x4, scoped, tag = 'scoped memory for tpu_custom_call.1']
    #allocation5 [shape = 'u8[4096]{0}', space=vmem, size = 0x1000, scoped, tag = 'output window, operand 0, single buffered']
    %7 = vsyncpa [#allocation3], 0
    %8 = vsyncpa [#allocation4], 0
    // Predicated region
    $region2: #{tpu_custom_call.1} parent=1 // pred_check
      _
    $region3: #{tpu_custom_call.1} parent=1 // pred_check_branch
      %10 = sbr.rel (0) target = $region5
    $region4: #{tpu_custom_call.1} parent=1 // pred_region
      %s12 = ssub.s32 128, 128
      %13 = vsyncadd [#allocation3], %s12
      %s14 = sshll.u32 [#allocation2], 4
      %s15 = int_to_ptr.vmem [resolvable:$true] %s14
      %20 = dma.hbm_to_vmem [thread:$0]  %s0, 128, %s15, [#allocation3], 64, 64, 4
    $region5: #{tpu_custom_call.1} parent=1 // pred_fallthru
      _
    // Predicated region
    $region6: #{tpu_custom_call.1} parent=1 // pred_check
      _
    $region7: #{tpu_custom_call.1} parent=1 // pred_check_branch
      %22 = sbr.rel (0) target = $region9
    $region8: #{tpu_custom_call.1} parent=1 // pred_region
      _
    $region9: #{tpu_custom_call.1} parent=1 // pred_fallthru
      _
    // Predicated region
    $region10: #{tpu_custom_call.1} parent=1 // pred_check
      _
    $region11: #{tpu_custom_call.1} parent=1 // pred_check_branch
      %24 = sbr.rel (0) target = $region13
    $region12: #{tpu_custom_call.1} parent=1 // pred_region
      %25 = dma.done [#allocation3], 128
    $region13: #{tpu_custom_call.1} parent=1 // pred_fallthru
      _
    %v26 = vld [vmem:[#allocation2] sm:$0xf]
    %v27 = vld [vmem:[#allocation2 + $0x4] sm:$0xf]
    %v28 = vunpack.c.l.bf16 %v26
    %v29 = vunpack.c.l.bf16 %v27
    %v30 = vmul.f32 %v28, %v28
    %v31 = vmul.f32 %v29, %v29
    %vm32 = vcmask 261120
    %v33 = vsel %vm32, %v30, 0.0
    %34 = vadd.xlane.f32.xlu0 %v33
    %v35 = vpop.xlane.xlu0 %34
    %v36 = vsel %vm32, %v31, 0.0
    %37 = vadd.xlane.f32.xlu0 %v36
    %v38 = vpop.xlane.xlu0 %37
    %v39 = vmul.f32 %v35, 0.03125
    %v40 = vmul.f32 %v38, 0.03125
    %v41 = vadd.f32 %v39, 1e-06
    %v42 = vadd.f32 %v40, 1e-06
    %v43 = vrsqrt.pop %v41
    %v44 = vrsqrt.pop %v42
    %v45 = vld [vmem:[%s1] sm:$0x1]
    %v46 = vmul.f32 %v28, %v43
    %v47 = vmul.f32 %v29, %v44
    %v49 = vlaneseq
    %v50 = vshrl.u32 %v49, 7
    %v51 = vsub.s32 0, %v50
    %v52 = vrot.slane %v45, %v51
    %v54 = vmul.f32 %v46, %v52
    %v55 = vmul.f32 %v47, %v52
    %v56 = vpack.c.bf16 %v55, %v54
    %v58 = vunpack.c.l.b16 %v56
    %v59 = vunpack.c.h.b16 %v56
    %v60 = vpack.c.b16 %v58, %v58
    %v61 = vpack.c.b16 %v59, %v59
    %vm64 = vcmask 257024
    %65 = vst.msk [vmem:[#allocation5] sm:$0xf] %vm64, %v60
    %66 = vst.msk [vmem:[#allocation5 + $0x4] sm:$0xf] %vm64, %v61
    // Predicated region
    $region14: #{tpu_custom_call.1} parent=1 // pred_check
      _
    $region15: #{tpu_custom_call.1} parent=1 // pred_check_branch
      %68 = sbr.rel (0) target = $region17
    $region16: #{tpu_custom_call.1} parent=1 // pred_region
      %s70 = ssub.s32 128, 128
      %71 = vsyncadd [#allocation4], %s70
      %s72 = sshll.u32 [#allocation5], 4
      %s73 = int_to_ptr.vmem [resolvable:$true] %s72
      %78 = dma.vmem_to_hbm [thread:$0]  %s73, 128, %s2, [#allocation4], 64, 64, 4
    $region17: #{tpu_custom_call.1} parent=1 // pred_fallthru
      _
    // Predicated region
    $region18: #{tpu_custom_call.1} parent=1 // pred_check
      _
    $region19: #{tpu_custom_call.1} parent=1 // pred_check_branch
      %80 = sbr.rel (0) target = $region21
    $region20: #{tpu_custom_call.1} parent=1 // pred_region
      %81 = dma.done [#allocation4], 128
    $region21: #{tpu_custom_call.1} parent=1 // pred_fallthru
      _
    %82 = vsyncpa [#allocation3], 1
    %83 = vsyncpa [#allocation4], 1

</llo_original>
